<compile_context>
chip_gen: v7x
topology: tpu7x:2x2x1
jax: 0.10.0
libtpu: 0.0.40
codegen_flags: <defaults>
</compile_context>

<pallas_src>
import functools

import jax
import jax.numpy as jnp
from jax import lax
from jax.experimental import pallas as pl
from jax.experimental.pallas import tpu as pltpu


def _round_up(x, m):
    return ((x + m - 1) // m) * m


def _vmem_limit_bytes():
    """~3/4 of physical VMEM: ~48 MiB on v7x, ~96 MiB on v5e/v6e."""
    try:
        cap = pltpu.get_tpu_info().vmem_capacity_bytes
        return int(cap * 3 // 4)
    except Exception:
        return 48 * 1024 * 1024


def _model_kernel(idx_ref, emb_ref, w1_ref, b1_ref, w2_ref, b2_ref, out_ref):
    """One M-tile of the fused forward pass.

    idx_ref: (tm, 1)  int32 token ids for this tile (VMEM)
    emb_ref: (Vp, Dp) bf16  embedding table (VMEM resident)
    w1_ref : (Dp, Dp) bf16
    b1_ref : (1, Dp)  f32
    w2_ref : (Dp, Vp) bf16
    b2_ref : (1, Vp)  f32   (padded vocab columns pre-set to -1e30)
    out_ref: (tm, Vp) f32   softmax probabilities for this M tile
    """
    tm = idx_ref.shape[0]
    Vp = emb_ref.shape[0]

    # --- Embedding lookup as a one-hot bf16 MXU matmul (no scalar gather loop). ---
    ids = idx_ref[...]                                                    # (tm, 1) int32
    col = lax.broadcasted_iota(jnp.int32, (tm, Vp), 1)                    # (tm, Vp)
    onehot = (col == ids).astype(jnp.bfloat16)                            # (tm, Vp)
    x = jnp.dot(onehot, emb_ref[...],
                preferred_element_type=jnp.float32).astype(jnp.bfloat16)  # (tm, Dp)

    # --- MLP: Linear -> ReLU -> Linear (bf16 operands, f32 accumulation / elementwise). ---
    h = jnp.dot(x, w1_ref[...], preferred_element_type=jnp.float32) + b1_ref[...]
    h = jnp.maximum(h, 0.0).astype(jnp.bfloat16)                          # (tm, Dp)
    a = jnp.dot(h, w2_ref[...], preferred_element_type=jnp.float32) + b2_ref[...]

    # --- f32 softmax over the vocab axis (pad mask already baked into b2). ---
    a_max = jnp.max(a, axis=-1, keepdims=True)
    e = jnp.exp(a - a_max)
    denom = jnp.sum(e, axis=-1, keepdims=True)
    out_ref[...] = e * (1.0 / denom)                                      # exact reciprocal


def prepare_params(emb, w1, b1, w2, b2):
    """Pad / cast parameters once (outside the per-call jit)."""
    V, D = emb.shape
    Dp = _round_up(max(D, 128), 128)
    Vp = _round_up(max(V, 128), 128)
    emb_p = jnp.zeros((Vp, Dp), jnp.bfloat16).at[:V, :D].set(emb.astype(jnp.bfloat16))
    w1_p = jnp.zeros((Dp, Dp), jnp.bfloat16).at[:D, :D].set(w1.astype(jnp.bfloat16))
    b1_p = jnp.zeros((1, Dp), jnp.float32).at[0, :D].set(b1.astype(jnp.float32))
    w2_p = jnp.zeros((Dp, Vp), jnp.bfloat16).at[:D, :V].set(w2.astype(jnp.bfloat16))
    # Bake the vocab-padding mask into the bias: padded logit columns become -1e30.
    b2_p = jnp.full((1, Vp), -1e30, jnp.float32).at[0, :V].set(b2.astype(jnp.float32))
    return emb_p, w1_p, b1_p, w2_p, b2_p


@functools.partial(jax.jit, static_argnames=("vocab_size", "block_m"))
def simple_broken_model_forward(idx, emb_p, w1_p, b1_p, w2_p, b2_p, *,
                                vocab_size, block_m=256):
    """idx: (B, S) int -> softmax probabilities (B, S, vocab_size) float32."""
    B, S = idx.shape
    Vp, Dp = emb_p.shape
    M = B * S

    tm = min(block_m, _round_up(max(M, 1), 128))     # rows per grid step (MXU-friendly)
    Mp = _round_up(M, tm)

    # Only idx is padded per call (padded rows use token 0; sliced away below).
    idx_p = jnp.zeros((Mp, 1), jnp.int32).at[:M, 0].set(idx.reshape(M).astype(jnp.int32))

    out = pl.pallas_call(
        _model_kernel,
        out_shape=jax.ShapeDtypeStruct((Mp, Vp), jnp.float32),
        grid=(Mp // tm,),
        in_specs=[
            pl.BlockSpec((tm, 1), lambda i: (i, 0)),     # token ids for this tile
            pl.BlockSpec((Vp, Dp), lambda i: (0, 0)),    # embedding table (resident)
            pl.BlockSpec((Dp, Dp), lambda i: (0, 0)),    # w1 (resident)
            pl.BlockSpec((1, Dp), lambda i: (0, 0)),     # b1
            pl.BlockSpec((Dp, Vp), lambda i: (0, 0)),    # w2 (resident)
            pl.BlockSpec((1, Vp), lambda i: (0, 0)),     # b2 (mask baked in)
        ],
        out_specs=pl.BlockSpec((tm, Vp), lambda i: (i, 0)),
        compiler_params=pltpu.CompilerParams(
            dimension_semantics=("parallel",),           # M tiles are independent
            vmem_limit_bytes=_vmem_limit_bytes(),        # generation-aware VMEM budget
        ),
    )(idx_p, emb_p, w1_p, b1_p, w2_p, b2_p)

    return out[:M, :vocab_size].reshape(B, S, vocab_size)


def _reference_forward(idx, emb, w1, b1, w2, b2):
    """Pure-JAX f32 reference mirroring the PyTorch forward."""
    x = emb[idx]                                      # (B, S, D)
    h = jnp.maximum(x @ w1 + b1, 0.0)
    a = h @ w2 + b2
    return jax.nn.softmax(a, axis=-1)


def init_params(key, vocab_size, d_model):
    """Deterministic synthetic parameters (same shapes as the PyTorch module)."""
    k_emb, k_w1, k_b1, k_w2, k_b2 = jax.random.split(key, 5)
    # nn.Embedding(vocab, d_model): weight (V, D)
    emb = jax.random.normal(k_emb, (vocab_size, d_model), jnp.float32)
    # nn.Linear(d_model, d_model): stored transposed so x @ w1 == torch Linear
    w1 = jax.random.normal(k_w1, (d_model, d_model), jnp.float32) * (1.0 / jnp.sqrt(d_model))
    b1 = jax.random.normal(k_b1, (d_model,), jnp.float32) * 0.01
    # nn.Linear(d_model, vocab): stored transposed (D, V)
    w2 = jax.random.normal(k_w2, (d_model, vocab_size), jnp.float32) * (1.0 / jnp.sqrt(d_model))
    b2 = jax.random.normal(k_b2, (vocab_size,), jnp.float32) * 0.01
    return emb, w1, b1, w2, b2


if __name__ == "__main__":
    config = {"vocab_size": 32, "d_model": 32}
    batch, seq = 2, 8

    key = jax.random.PRNGKey(0)
    k_params, k_idx = jax.random.split(key)

    emb, w1, b1, w2, b2 = init_params(k_params, config["vocab_size"], config["d_model"])
    idx = jax.random.randint(k_idx, (batch, seq), 0, config["vocab_size"], dtype=jnp.int32)

    # Pad / cast parameters once (hoisted out of the jitted forward).
    emb_p, w1_p, b1_p, w2_p, b2_p = prepare_params(emb, w1, b1, w2, b2)

    # TODO(synk): targets branch (F.cross_entropy on the softmax output) is left to plain JAX callers.
    probs = simple_broken_model_forward(idx, emb_p, w1_p, b1_p, w2_p, b2_p,
                                        vocab_size=config["vocab_size"])
    probs = jax.block_until_ready(probs)

    assert probs.shape == (batch, seq, config["vocab_size"])
    # Softmax rows sum to 1 (exact reciprocal in-kernel).
    assert jnp.allclose(jnp.sum(probs, axis=-1), 1.0, atol=2e-3)
    # Matches the f32 reference up to bf16-matmul rounding.
    ref = _reference_forward(idx, emb, w1, b1, w2, b2)
    assert jnp.allclose(probs, ref, atol=3e-2)

    print("KERNEL_OK")
</pallas_src>

<mosaic_0001>
module attributes {stable_mosaic.version = 11 : i64} {
  func.func @_model_kernel(%arg0: i32, %arg1: memref<128x1xi32, #tpu.memory_space<vmem>>, %arg2: memref<128x128xbf16, #tpu.memory_space<vmem>>, %arg3: memref<128x128xbf16, #tpu.memory_space<vmem>>, %arg4: memref<1x128xf32, #tpu.memory_space<vmem>>, %arg5: memref<128x128xbf16, #tpu.memory_space<vmem>>, %arg6: memref<1x128xf32, #tpu.memory_space<vmem>>, %arg7: memref<128x128xf32, #tpu.memory_space<vmem>>) attributes {dimension_semantics = [#tpu.dimension_semantics<parallel>], iteration_bounds = array<i64: 1>, scalar_prefetch = 0 : i64, scratch_operands = 0 : i64, tpu.core_type = #tpu.core_type<tc>, window_params = [{transform_indices = @transform_0, window_bounds = array<i64: 128, 1>}, {pipeline_mode = #tpu.pipeline_mode<synchronous>, transform_indices = @transform_1, window_bounds = array<i64: 128, 128>}, {pipeline_mode = #tpu.pipeline_mode<synchronous>, transform_indices = @transform_2, window_bounds = array<i64: 128, 128>}, {pipeline_mode = #tpu.pipeline_mode<synchronous>, transform_indices = @transform_3, window_bounds = array<i64: 1, 128>}, {pipeline_mode = #tpu.pipeline_mode<synchronous>, transform_indices = @transform_4, window_bounds = array<i64: 128, 128>}, {pipeline_mode = #tpu.pipeline_mode<synchronous>, transform_indices = @transform_5, window_bounds = array<i64: 1, 128>}, {transform_indices = @transform_6, window_bounds = array<i64: 128, 128>}]} {
    %c0 = arith.constant 0 : index
    %c0_0 = arith.constant 0 : index
    %0 = vector.load %arg1[%c0, %c0_0] : memref<128x1xi32, #tpu.memory_space<vmem>>, vector<128x1xi32>
    %1 = tpu.iota {dimensions = array<i32: 1>} : vector<128x128xi32>
    %2 = vector.broadcast %0 : vector<128x1xi32> to vector<128x128xi32>
    %3 = arith.cmpi eq, %1, %2 : vector<128x128xi32>
    %4 = arith.extui %3 : vector<128x128xi1> to vector<128x128xi32>
    %5 = arith.sitofp %4 : vector<128x128xi32> to vector<128x128xf32>
    %6 = arith.truncf %5 : vector<128x128xf32> to vector<128x128xbf16>
    %c0_1 = arith.constant 0 : index
    %c0_2 = arith.constant 0 : index
    %7 = vector.load %arg2[%c0_1, %c0_2] : memref<128x128xbf16, #tpu.memory_space<vmem>>, vector<128x128xbf16>
    %cst = arith.constant dense<0.000000e+00> : vector<128x128xf32>
    %8 = tpu.matmul %6, %7, %cst {dimension_numbers = #tpu.dot_dimension_numbers<[1], [0], [0], [1], [0, 0, 1, 1], [], []>} : vector<128x128xbf16>, vector<128x128xbf16>, vector<128x128xf32> -> vector<128x128xf32>
    %9 = arith.truncf %8 : vector<128x128xf32> to vector<128x128xbf16>
    %c0_3 = arith.constant 0 : index
    %c0_4 = arith.constant 0 : index
    %10 = vector.load %arg3[%c0_3, %c0_4] : memref<128x128xbf16, #tpu.memory_space<vmem>>, vector<128x128xbf16>
    %cst_5 = arith.constant dense<0.000000e+00> : vector<128x128xf32>
    %11 = tpu.matmul %9, %10, %cst_5 {dimension_numbers = #tpu.dot_dimension_numbers<[1], [0], [0], [1], [0, 0, 1, 1], [], []>} : vector<128x128xbf16>, vector<128x128xbf16>, vector<128x128xf32> -> vector<128x128xf32>
    %c0_6 = arith.constant 0 : index
    %c0_7 = arith.constant 0 : index
    %12 = vector.load %arg4[%c0_6, %c0_7] : memref<1x128xf32, #tpu.memory_space<vmem>>, vector<1x128xf32>
    %13 = vector.broadcast %12 : vector<1x128xf32> to vector<128x128xf32>
    %14 = arith.addf %11, %13 : vector<128x128xf32>
    %cst_8 = arith.constant 0.000000e+00 : f32
    %15 = vector.broadcast %cst_8 : f32 to vector<128x128xf32>
    %16 = arith.maximumf %14, %15 : vector<128x128xf32>
    %17 = arith.truncf %16 : vector<128x128xf32> to vector<128x128xbf16>
    %c0_9 = arith.constant 0 : index
    %c0_10 = arith.constant 0 : index
    %18 = vector.load %arg5[%c0_9, %c0_10] : memref<128x128xbf16, #tpu.memory_space<vmem>>, vector<128x128xbf16>
    %cst_11 = arith.constant dense<0.000000e+00> : vector<128x128xf32>
    %19 = tpu.matmul %17, %18, %cst_11 {dimension_numbers = #tpu.dot_dimension_numbers<[1], [0], [0], [1], [0, 0, 1, 1], [], []>} : vector<128x128xbf16>, vector<128x128xbf16>, vector<128x128xf32> -> vector<128x128xf32>
    %c0_12 = arith.constant 0 : index
    %c0_13 = arith.constant 0 : index
    %20 = vector.load %arg6[%c0_12, %c0_13] : memref<1x128xf32, #tpu.memory_space<vmem>>, vector<1x128xf32>
    %21 = vector.broadcast %20 : vector<1x128xf32> to vector<128x128xf32>
    %22 = arith.addf %19, %21 : vector<128x128xf32>
    %cst_14 = arith.constant dense<0xFF800000> : vector<128xf32>
    %23 = vector.multi_reduction <maximumf>, %22, %cst_14 [1] : vector<128x128xf32> to vector<128xf32>
    %24 = vector.shape_cast %23 : vector<128xf32> to vector<128x1xf32>
    %25 = vector.broadcast %24 : vector<128x1xf32> to vector<128x128xf32>
    %26 = arith.subf %22, %25 : vector<128x128xf32>
    %27 = math.exp %26 : vector<128x128xf32>
    %cst_15 = arith.constant dense<0.000000e+00> : vector<128xf32>
    %28 = vector.multi_reduction <add>, %27, %cst_15 [1] : vector<128x128xf32> to vector<128xf32>
    %29 = vector.shape_cast %28 : vector<128xf32> to vector<128x1xf32>
    %cst_16 = arith.constant 1.000000e+00 : f32
    %30 = vector.broadcast %cst_16 : f32 to vector<128x1xf32>
    %31 = arith.divf %30, %29 : vector<128x1xf32>
    %32 = vector.broadcast %31 : vector<128x1xf32> to vector<128x128xf32>
    %33 = arith.mulf %27, %32 : vector<128x128xf32>
    %c0_17 = arith.constant 0 : index
    %c0_18 = arith.constant 0 : index
    %34 = vector.load %arg7[%c0_17, %c0_18] : memref<128x128xf32, #tpu.memory_space<vmem>>, vector<128x128xf32>
    tpu.vector_store %arg7[%c0_17, %c0_18], %33 {strides = array<i32>} : memref<128x128xf32, #tpu.memory_space<vmem>>, vector<128x128xf32>,
    return
  }
  func.func @transform_0(%arg0: i32) -> (i32, i32) {
    %c0_i32 = arith.constant 0 : i32
    %c0_i32_0 = arith.constant 0 : i32
    return %arg0, %c0_i32 : i32, i32
  }
  func.func @transform_1(%arg0: i32) -> (i32, i32) {
    %c0_i32 = arith.constant 0 : i32
    %c0_i32_0 = arith.constant 0 : i32
    %c0_i32_1 = arith.constant 0 : i32
    return %c0_i32, %c0_i32_0 : i32, i32
  }
  func.func @transform_2(%arg0: i32) -> (i32, i32) {
    %c0_i32 = arith.constant 0 : i32
    %c0_i32_0 = arith.constant 0 : i32
    %c0_i32_1 = arith.constant 0 : i32
    return %c0_i32, %c0_i32_0 : i32, i32
  }
  func.func @transform_3(%arg0: i32) -> (i32, i32) {
    %c0_i32 = arith.constant 0 : i32
    %c0_i32_0 = arith.constant 0 : i32
    %c0_i32_1 = arith.constant 0 : i32
    return %c0_i32, %c0_i32_0 : i32, i32
  }
  func.func @transform_4(%arg0: i32) -> (i32, i32) {
    %c0_i32 = arith.constant 0 : i32
    %c0_i32_0 = arith.constant 0 : i32
    %c0_i32_1 = arith.constant 0 : i32
    return %c0_i32, %c0_i32_0 : i32, i32
  }
  func.func @transform_5(%arg0: i32) -> (i32, i32) {
    %c0_i32 = arith.constant 0 : i32
    %c0_i32_0 = arith.constant 0 : i32
    %c0_i32_1 = arith.constant 0 : i32
    return %c0_i32, %c0_i32_0 : i32, i32
  }
  func.func @transform_6(%arg0: i32) -> (i32, i32) {
    %c0_i32 = arith.constant 0 : i32
    %c0_i32_0 = arith.constant 0 : i32
    return %arg0, %c0_i32 : i32, i32
  }
}

</mosaic_0001>

<llo_original>
// kernel: simple_broken_model_forward.1
$region0: #{simple_broken_model_forward.1}
  #allocation0 [shape = 'u32[]', space=smem, size = 0x4, offset = 0x4, fixed_abs, tag = 'smem constant byte address 0x4 - core index']
  #allocation1 [shape = 'u32[144,128]{1,0:T(1,128)}', space=vmem, size = 0x12000, scoped, tag = 'internal scratch']
  %s0 = inlined_call_operand.vmem [shape: s32[128,1], index: 0, kind: input, shape index: {}]
  %s1 = inlined_call_operand.vmem [shape: bf16[128,128], index: 1, kind: input, shape index: {}]
  %s2 = inlined_call_operand.vmem [shape: bf16[128,128], index: 2, kind: input, shape index: {}]
  %s3 = inlined_call_operand.vmem [shape: f32[1,128], index: 3, kind: input, shape index: {}]
  %s4 = inlined_call_operand.hbm [shape: bf16[128,128], index: 4, kind: input, shape index: {}]
  %s5 = inlined_call_operand.vmem [shape: f32[1,128], index: 5, kind: input, shape index: {}]
  %s6 = inlined_call_operand.vmem [shape: f32[128,128], index: 6, kind: output, shape index: {}]
  %s7 = sld [smem:[#allocation0]]
  $region38: #{simple_broken_model_forward.1} parent=0
    _
  %s9 = ssub.s32 1, %s7
  %s10 = scalar_select 0, %s9, %s7
  $region1: #{simple_broken_model_forward.1} parent=0
    #allocation2 [shape = 'u8[32768]{0}', space=vmem, size = 0x8000, scoped, tag = 'input window, operand 4, single buffered']
    #allocation3 [shape = 's32[1]{0}', space=sflag, size = 0x4, scoped, tag = 'scoped memory for simple_broken_model_forward.1']
    %11 = vsyncpa [#allocation3], 0
    // Predicated region
    $region2: #{simple_broken_model_forward.1} parent=1 // pred_check
      _
    $region3: #{simple_broken_model_forward.1} parent=1 // pred_check_branch
      %13 = sbr.rel (0) target = $region5
    $region4: #{simple_broken_model_forward.1} parent=1 // pred_region
      _
    $region5: #{simple_broken_model_forward.1} parent=1 // pred_fallthru
      _
    // Predicated region
    $region6: #{simple_broken_model_forward.1} parent=1 // pred_check
      _
    $region7: #{simple_broken_model_forward.1} parent=1 // pred_check_branch
      %15 = sbr.rel (0) target = $region9
    $region8: #{simple_broken_model_forward.1} parent=1 // pred_region
      _
    $region9: #{simple_broken_model_forward.1} parent=1 // pred_fallthru
      _
    // Predicated region
    $region10: #{simple_broken_model_forward.1} parent=1 // pred_check
      _
    $region11: #{simple_broken_model_forward.1} parent=1 // pred_check_branch
      %17 = sbr.rel (0) target = $region13
    $region12: #{simple_broken_model_forward.1} parent=1 // pred_region
      _
    $region13: #{simple_broken_model_forward.1} parent=1 // pred_fallthru
      _
    // Predicated region
    $region14: #{simple_broken_model_forward.1} parent=1 // pred_check
      _
    $region15: #{simple_broken_model_forward.1} parent=1 // pred_check_branch
      %19 = sbr.rel (0) target = $region17
    $region16: #{simple_broken_model_forward.1} parent=1 // pred_region
      _
    $region17: #{simple_broken_model_forward.1} parent=1 // pred_fallthru
      _
    // Predicated region
    $region18: #{simple_broken_model_forward.1} parent=1 // pred_check
      _
    $region19: #{simple_broken_model_forward.1} parent=1 // pred_check_branch
      %21 = sbr.rel (0) target = $region21
    $region20: #{simple_broken_model_forward.1} parent=1 // pred_region
      %s23 = ssub.s32 1024, 1024
      %24 = vsyncadd [#allocation3], %s23
      %s25 = sshll.u32 [#allocation2], 4
      %s26 = int_to_ptr.vmem [resolvable:$true] %s25
      %31 = dma.hbm_to_vmem [thread:$0]  %s4, 1024, %s26, [#allocation3], 64, 64, 4
    $region21: #{simple_broken_model_forward.1} parent=1 // pred_fallthru
      _
    // Predicated region
    $region22: #{simple_broken_model_forward.1} parent=1 // pred_check
      _
    $region23: #{simple_broken_model_forward.1} parent=1 // pred_check_branch
      %33 = sbr.rel (0) target = $region25
    $region24: #{simple_broken_model_forward.1} parent=1 // pred_region
      _
    $region25: #{simple_broken_model_forward.1} parent=1 // pred_fallthru
      _
    // Predicated region
    $region26: #{simple_broken_model_forward.1} parent=1 // pred_check
      _
    $region27: #{simple_broken_model_forward.1} parent=1 // pred_check_branch
      %35 = sbr.rel (0) target = $region29
    $region28: #{simple_broken_model_forward.1} parent=1 // pred_region
      %36 = dma.done [#allocation3], 1024
    $region29: #{simple_broken_model_forward.1} parent=1 // pred_fallthru
      _
    %v38 = vld [vmem:[%s0] sm:$0xff]
    %v39 = vld [vmem:[%s0 + $0x8] sm:$0xff]
    %v40 = vld [vmem:[%s0 + $0x10] sm:$0xff]
    %v41 = vld [vmem:[%s0 + $0x18] sm:$0xff]
    %v42 = vld [vmem:[%s0 + $0x20] sm:$0xff]
    %v43 = vld [vmem:[%s0 + $0x28] sm:$0xff]
    %v44 = vld [vmem:[%s0 + $0x30] sm:$0xff]
    %v45 = vld [vmem:[%s0 + $0x38] sm:$0xff]
    %v46 = vld [vmem:[%s0 + $0x40] sm:$0xff]
    %v47 = vld [vmem:[%s0 + $0x48] sm:$0xff]
    %v48 = vld [vmem:[%s0 + $0x50] sm:$0xff]
    %v49 = vld [vmem:[%s0 + $0x58] sm:$0xff]
    %v50 = vld [vmem:[%s0 + $0x60] sm:$0xff]
    %v51 = vld [vmem:[%s0 + $0x68] sm:$0xff]
    %v52 = vld [vmem:[%s0 + $0x70] sm:$0xff]
    %v53 = vld [vmem:[%s0 + $0x78] sm:$0xff]
    %v54 = vlaneseq
    %v55 = vand.u32 %v54, 127
    %56 = vset.pattern.permute.xlu0 0
    %57 = vperm.xlu0 %56, %v38
    %v58 = vpop.permute.xlu0 %57
    %59 = vset.pattern.permute.xlu0 0
    %60 = vperm.xlu0 %59, %v39
    %v61 = vpop.permute.xlu0 %60
    %62 = vset.pattern.permute.xlu0 0
    %63 = vperm.xlu0 %62, %v40
    %v64 = vpop.permute.xlu0 %63
    %65 = vset.pattern.permute.xlu0 0
    %66 = vperm.xlu0 %65, %v41
    %v67 = vpop.permute.xlu0 %66
    %68 = vset.pattern.permute.xlu0 0
    %69 = vperm.xlu0 %68, %v42
    %v70 = vpop.permute.xlu0 %69
    %71 = vset.pattern.permute.xlu0 0
    %72 = vperm.xlu0 %71, %v43
    %v73 = vpop.permute.xlu0 %72
    %74 = vset.pattern.permute.xlu0 0
    %75 = vperm.xlu0 %74, %v44
    %v76 = vpop.permute.xlu0 %75
    %77 = vset.pattern.permute.xlu0 0
    %78 = vperm.xlu0 %77, %v45
    %v79 = vpop.permute.xlu0 %78
    %80 = vset.pattern.permute.xlu0 0
    %81 = vperm.xlu0 %80, %v46
    %v82 = vpop.permute.xlu0 %81
    %83 = vset.pattern.permute.xlu0 0
    %84 = vperm.xlu0 %83, %v47
    %v85 = vpop.permute.xlu0 %84
    %86 = vset.pattern.permute.xlu0 0
    %87 = vperm.xlu0 %86, %v48
    %v88 = vpop.permute.xlu0 %87
    %89 = vset.pattern.permute.xlu0 0
    %90 = vperm.xlu0 %89, %v49
    %v91 = vpop.permute.xlu0 %90
    %92 = vset.pattern.permute.xlu0 0
    %93 = vperm.xlu0 %92, %v50
    %v94 = vpop.permute.xlu0 %93
    %95 = vset.pattern.permute.xlu0 0
    %96 = vperm.xlu0 %95, %v51
    %v97 = vpop.permute.xlu0 %96
    %98 = vset.pattern.permute.xlu0 0
    %99 = vperm.xlu0 %98, %v52
    %v100 = vpop.permute.xlu0 %99
    %101 = vset.pattern.permute.xlu0 0
    %102 = vperm.xlu0 %101, %v53
    %v103 = vpop.permute.xlu0 %102
    %vm104 = vcmp.eq.s32.totalorder %v55, %v58
    %vm105 = vcmp.eq.s32.totalorder %v55, %v61
    %vm106 = vcmp.eq.s32.totalorder %v55, %v64
    %vm107 = vcmp.eq.s32.totalorder %v55, %v67
    %vm108 = vcmp.eq.s32.totalorder %v55, %v70
    %vm109 = vcmp.eq.s32.totalorder %v55, %v73
    %vm110 = vcmp.eq.s32.totalorder %v55, %v76
    %vm111 = vcmp.eq.s32.totalorder %v55, %v79
    %vm112 = vcmp.eq.s32.totalorder %v55, %v82
    %vm113 = vcmp.eq.s32.totalorder %v55, %v85
    %vm114 = vcmp.eq.s32.totalorder %v55, %v88
    %vm115 = vcmp.eq.s32.totalorder %v55, %v91
    %vm116 = vcmp.eq.s32.totalorder %v55, %v94
    %vm117 = vcmp.eq.s32.totalorder %v55, %v97
    %vm118 = vcmp.eq.s32.totalorder %v55, %v100
    %vm119 = vcmp.eq.s32.totalorder %v55, %v103
    %v120 = vsel %vm104, 1, 0
    %v121 = vsel %vm105, 1, 0
    %v122 = vsel %vm106, 1, 0
    %v123 = vsel %vm107, 1, 0
    %v124 = vsel %vm108, 1, 0
    %v125 = vsel %vm109, 1, 0
    %v126 = vsel %vm110, 1, 0
    %v127 = vsel %vm111, 1, 0
    %v128 = vsel %vm112, 1, 0
    %v129 = vsel %vm113, 1, 0
    %v130 = vsel %vm114, 1, 0
    %v131 = vsel %vm115, 1, 0
    %v132 = vsel %vm116, 1, 0
    %v133 = vsel %vm117, 1, 0
    %v134 = vsel %vm118, 1, 0
    %v135 = vsel %vm119, 1, 0
    %v136 = vcvt.s32.f32 %v120
    %v137 = vcvt.s32.f32 %v121
    %v138 = vcvt.s32.f32 %v122
    %v139 = vcvt.s32.f32 %v123
    %v140 = vcvt.s32.f32 %v124
    %v141 = vcvt.s32.f32 %v125
    %v142 = vcvt.s32.f32 %v126
    %v143 = vcvt.s32.f32 %v127
    %v144 = vcvt.s32.f32 %v128
    %v145 = vcvt.s32.f32 %v129
    %v146 = vcvt.s32.f32 %v130
    %v147 = vcvt.s32.f32 %v131
    %v148 = vcvt.s32.f32 %v132
    %v149 = vcvt.s32.f32 %v133
    %v150 = vcvt.s32.f32 %v134
    %v151 = vcvt.s32.f32 %v135
    %v152 = vpack.c.bf16 %v137, %v136
    %v153 = vpack.c.bf16 %v139, %v138
    %v154 = vpack.c.bf16 %v141, %v140
    %v155 = vpack.c.bf16 %v143, %v142
    %v156 = vpack.c.bf16 %v145, %v144
    %v157 = vpack.c.bf16 %v147, %v146
    %v158 = vpack.c.bf16 %v149, %v148
    %v159 = vpack.c.bf16 %v151, %v150
    %v160 = vld [vmem:[%s1] sm:$0xf]
    %v161 = vld [vmem:[%s1 + $0x4] sm:$0xf]
    %v162 = vld [vmem:[%s1 + $0x8] sm:$0xf]
    %v163 = vld [vmem:[%s1 + $0xc] sm:$0xf]
    %v164 = vld [vmem:[%s1 + $0x10] sm:$0xf]
    %v165 = vld [vmem:[%s1 + $0x14] sm:$0xf]
    %v166 = vld [vmem:[%s1 + $0x18] sm:$0xf]
    %v167 = vld [vmem:[%s1 + $0x1c] sm:$0xf]
    %v168 = vld [vmem:[%s1 + $0x20] sm:$0xf]
    %v169 = vld [vmem:[%s1 + $0x24] sm:$0xf]
    %v170 = vld [vmem:[%s1 + $0x28] sm:$0xf]
    %v171 = vld [vmem:[%s1 + $0x2c] sm:$0xf]
    %v172 = vld [vmem:[%s1 + $0x30] sm:$0xf]
    %v173 = vld [vmem:[%s1 + $0x34] sm:$0xf]
    %v174 = vld [vmem:[%s1 + $0x38] sm:$0xf]
    %v175 = vld [vmem:[%s1 + $0x3c] sm:$0xf]
    %v192 = vunpack.c.l.b16 %v160
    %v193 = vunpack.c.l.b16 %v161
    %v194 = vunpack.c.l.b16 %v162
    %v195 = vunpack.c.l.b16 %v163
    %v196 = vunpack.c.l.b16 %v164
    %v197 = vunpack.c.l.b16 %v165
    %v198 = vunpack.c.l.b16 %v166
    %v199 = vunpack.c.l.b16 %v167
    %v200 = vunpack.c.l.b16 %v168
    %v201 = vunpack.c.l.b16 %v169
    %v202 = vunpack.c.l.b16 %v170
    %v203 = vunpack.c.l.b16 %v171
    %v204 = vunpack.c.l.b16 %v172
    %v205 = vunpack.c.l.b16 %v173
    %v206 = vunpack.c.l.b16 %v174
    %v207 = vunpack.c.l.b16 %v175
    %v208 = vpack.c.b16 %v193, %v192
    %v209 = vpack.c.b16 %v195, %v194
    %v210 = vpack.c.b16 %v197, %v196
    %v211 = vpack.c.b16 %v199, %v198
    %v212 = vpack.c.b16 %v201, %v200
    %v213 = vpack.c.b16 %v203, %v202
    %v214 = vpack.c.b16 %v205, %v204
    %v215 = vpack.c.b16 %v207, %v206
    %224 = vmatprep.subr.bf16.mxu0 0
    %225 = vmatpush1.bf16.msra.mxu0 %v208
    %226 = vmatprep.subr.bf16.mxu0 0
    %227 = vmatpush1.bf16.msra.mxu0 %v209
    %228 = vmatprep.subr.bf16.mxu0 0
    %229 = vmatpush1.bf16.msra.mxu0 %v210
    %230 = vmatprep.subr.bf16.mxu0 0
    %231 = vmatpush1.bf16.msra.mxu0 %v211
    %232 = vmatprep.subr.bf16.mxu0 0
    %233 = vmatpush1.bf16.msra.mxu0 %v212
    %234 = vmatprep.subr.bf16.mxu0 0
    %235 = vmatpush1.bf16.msra.mxu0 %v213
    %236 = vmatprep.subr.bf16.mxu0 0
    %237 = vmatpush1.bf16.msra.mxu0 %v214
    %238 = vmatprep.subr.bf16.mxu0 0
    %239 = vmatpush1.bf16.msra.mxu0 %v215
    %240 = vmatprep.subr.bf16.mxu0 0
    %241 = vmatpush1.bf16.msra.mxu0 0
    %242 = vmatprep.subr.bf16.mxu0 0
    %243 = vmatpush1.bf16.msra.mxu0 0
    %244 = vmatprep.subr.bf16.mxu0 0
    %245 = vmatpush1.bf16.msra.mxu0 0
    %246 = vmatprep.subr.bf16.mxu0 0
    %247 = vmatpush1.bf16.msra.mxu0 0
    %248 = vmatprep.subr.bf16.mxu0 0
    %249 = vmatpush1.bf16.msra.mxu0 0
    %250 = vmatprep.subr.bf16.mxu0 0
    %251 = vmatpush1.bf16.msra.mxu0 0
    %252 = vmatprep.subr.bf16.mxu0 0
    %253 = vmatpush1.bf16.msra.mxu0 0
    %254 = vmatprep.subr.bf16.mxu0 0
    %255 = vmatpush1.bf16.msra.mxu0 0
    %256 = vmatprep.mubr.bf16.mxu0 0
    %257 = vmatmul.mubr.bf16.gmra.mrb[0].mxu0 %v152
    %v258 = vpop.f32.mrb[0].mxu0
    %v259 = vadd.f32 0.0, %v258
    %v260 = vpop.f32.mrb[0].mxu0
    %v261 = vpop.f32.mrb[0].mxu0
    %v262 = vadd.f32 0.0, %v261
    %v263 = vpop.f32.mrb[0].mxu0
    %264 = vmatprep.mubr.bf16.mxu0 0
    %265 = vmatmul.mubr.bf16.gmra.mrb[0].mxu0 %v153
    %v266 = vpop.f32.mrb[0].mxu0
    %v267 = vadd.f32 0.0, %v266
    %v268 = vpop.f32.mrb[0].mxu0
    %v269 = vpop.f32.mrb[0].mxu0
    %v270 = vadd.f32 0.0, %v269
    %v271 = vpop.f32.mrb[0].mxu0
    %272 = vmatprep.mubr.bf16.mxu0 0
    %273 = vmatmul.mubr.bf16.gmra.mrb[0].mxu0 %v154
    %v274 = vpop.f32.mrb[0].mxu0
    %v275 = vadd.f32 0.0, %v274
    %v276 = vpop.f32.mrb[0].mxu0
    %v277 = vpop.f32.mrb[0].mxu0
    %v278 = vadd.f32 0.0, %v277
    %v279 = vpop.f32.mrb[0].mxu0
    %280 = vmatprep.mubr.bf16.mxu0 0
    %281 = vmatmul.mubr.bf16.gmra.mrb[0].mxu0 %v155
    %v282 = vpop.f32.mrb[0].mxu0
    %v283 = vadd.f32 0.0, %v282
    %v284 = vpop.f32.mrb[0].mxu0
    %v285 = vpop.f32.mrb[0].mxu0
    %v286 = vadd.f32 0.0, %v285
    %v287 = vpop.f32.mrb[0].mxu0
    %288 = vmatprep.mubr.bf16.mxu0 0
    %289 = vmatmul.mubr.bf16.gmra.mrb[0].mxu0 %v156
    %v290 = vpop.f32.mrb[0].mxu0
    %v291 = vadd.f32 0.0, %v290
    %v292 = vpop.f32.mrb[0].mxu0
    %v293 = vpop.f32.mrb[0].mxu0
    %v294 = vadd.f32 0.0, %v293
    %v295 = vpop.f32.mrb[0].mxu0
    %296 = vmatprep.mubr.bf16.mxu0 0
    %297 = vmatmul.mubr.bf16.gmra.mrb[0].mxu0 %v157
    %v298 = vpop.f32.mrb[0].mxu0
    %v299 = vadd.f32 0.0, %v298
    %v300 = vpop.f32.mrb[0].mxu0
    %v301 = vpop.f32.mrb[0].mxu0
    %v302 = vadd.f32 0.0, %v301
    %v303 = vpop.f32.mrb[0].mxu0
    %304 = vmatprep.mubr.bf16.mxu0 0
    %305 = vmatmul.mubr.bf16.gmra.mrb[0].mxu0 %v158
    %v306 = vpop.f32.mrb[0].mxu0
    %v307 = vadd.f32 0.0, %v306
    %v308 = vpop.f32.mrb[0].mxu0
    %v309 = vpop.f32.mrb[0].mxu0
    %v310 = vadd.f32 0.0, %v309
    %v311 = vpop.f32.mrb[0].mxu0
    %312 = vmatprep.mubr.bf16.mxu0 0
    %313 = vmatmul.mubr.bf16.gmra.mrb[0].mxu0 %v159
    %v314 = vpop.f32.mrb[0].mxu0
    %v315 = vadd.f32 0.0, %v314
    %v316 = vpop.f32.mrb[0].mxu0
    %v317 = vpop.f32.mrb[0].mxu0
    %v318 = vadd.f32 0.0, %v317
    %v319 = vpop.f32.mrb[0].mxu0
    %320 = vdwg.mxu0
    %v321 = vpack.c.bf16 %v262, %v259
    %v322 = vpack.c.bf16 %v270, %v267
    %v323 = vpack.c.bf16 %v278, %v275
    %v324 = vpack.c.bf16 %v286, %v283
    %v325 = vpack.c.bf16 %v294, %v291
    %v326 = vpack.c.bf16 %v302, %v299
    %v327 = vpack.c.bf16 %v310, %v307
    %v328 = vpack.c.bf16 %v318, %v315
    %v329 = vld [vmem:[%s2] sm:$0xf]
    %v330 = vld [vmem:[%s2 + $0x4] sm:$0xf]
    %v331 = vld [vmem:[%s2 + $0x8] sm:$0xf]
    %v332 = vld [vmem:[%s2 + $0xc] sm:$0xf]
    %v333 = vld [vmem:[%s2 + $0x10] sm:$0xf]
    %v334 = vld [vmem:[%s2 + $0x14] sm:$0xf]
    %v335 = vld [vmem:[%s2 + $0x18] sm:$0xf]
    %v336 = vld [vmem:[%s2 + $0x1c] sm:$0xf]
    %v337 = vld [vmem:[%s2 + $0x20] sm:$0xf]
    %v338 = vld [vmem:[%s2 + $0x24] sm:$0xf]
    %v339 = vld [vmem:[%s2 + $0x28] sm:$0xf]
    %v340 = vld [vmem:[%s2 + $0x2c] sm:$0xf]
    %v341 = vld [vmem:[%s2 + $0x30] sm:$0xf]
    %v342 = vld [vmem:[%s2 + $0x34] sm:$0xf]
    %v343 = vld [vmem:[%s2 + $0x38] sm:$0xf]
    %v344 = vld [vmem:[%s2 + $0x3c] sm:$0xf]
    %v345 = vld [vmem:[%s3] sm:$0x1]
    %v347 = vlaneseq
    %v348 = vshrl.u32 %v347, 7
    %v349 = vsub.s32 0, %v348
    %v350 = vrot.slane %v345, %v349
    %v368 = vunpack.c.l.b16 %v329
    %v369 = vunpack.c.l.b16 %v330
    %v370 = vunpack.c.l.b16 %v331
    %v371 = vunpack.c.l.b16 %v332
    %v372 = vunpack.c.l.b16 %v333
    %v373 = vunpack.c.l.b16 %v334
    %v374 = vunpack.c.l.b16 %v335
    %v375 = vunpack.c.l.b16 %v336
    %v376 = vunpack.c.l.b16 %v337
    %v377 = vunpack.c.l.b16 %v338
    %v378 = vunpack.c.l.b16 %v339
    %v379 = vunpack.c.l.b16 %v340
    %v380 = vunpack.c.l.b16 %v341
    %v381 = vunpack.c.l.b16 %v342
    %v382 = vunpack.c.l.b16 %v343
    %v383 = vunpack.c.l.b16 %v344
    %v384 = vpack.c.b16 %v369, %v368
    %v385 = vpack.c.b16 %v371, %v370
    %v386 = vpack.c.b16 %v373, %v372
    %v387 = vpack.c.b16 %v375, %v374
    %v388 = vpack.c.b16 %v377, %v376
    %v389 = vpack.c.b16 %v379, %v378
    %v390 = vpack.c.b16 %v381, %v380
    %v391 = vpack.c.b16 %v383, %v382
    %400 = vmatprep.subr.bf16.mxu0 0
    %401 = vmatpush1.bf16.msra.mxu0 %v384
    %402 = vmatprep.subr.bf16.mxu0 0
    %403 = vmatpush1.bf16.msra.mxu0 %v385
    %404 = vmatprep.subr.bf16.mxu0 0
    %405 = vmatpush1.bf16.msra.mxu0 %v386
    %406 = vmatprep.subr.bf16.mxu0 0
    %407 = vmatpush1.bf16.msra.mxu0 %v387
    %408 = vmatprep.subr.bf16.mxu0 0
    %409 = vmatpush1.bf16.msra.mxu0 %v388
    %410 = vmatprep.subr.bf16.mxu0 0
    %411 = vmatpush1.bf16.msra.mxu0 %v389
    %412 = vmatprep.subr.bf16.mxu0 0
    %413 = vmatpush1.bf16.msra.mxu0 %v390
    %414 = vmatprep.subr.bf16.mxu0 0
    %415 = vmatpush1.bf16.msra.mxu0 %v391
    %416 = vmatprep.subr.bf16.mxu0 0
    %417 = vmatpush1.bf16.msra.mxu0 0
    %418 = vmatprep.subr.bf16.mxu0 0
    %419 = vmatpush1.bf16.msra.mxu0 0
    %420 = vmatprep.subr.bf16.mxu0 0
    %421 = vmatpush1.bf16.msra.mxu0 0
    %422 = vmatprep.subr.bf16.mxu0 0
    %423 = vmatpush1.bf16.msra.mxu0 0
    %424 = vmatprep.subr.bf16.mxu0 0
    %425 = vmatpush1.bf16.msra.mxu0 0
    %426 = vmatprep.subr.bf16.mxu0 0
    %427 = vmatpush1.bf16.msra.mxu0 0
    %428 = vmatprep.subr.bf16.mxu0 0
    %429 = vmatpush1.bf16.msra.mxu0 0
    %430 = vmatprep.subr.bf16.mxu0 0
    %431 = vmatpush1.bf16.msra.mxu0 0
    %432 = vmatprep.mubr.bf16.mxu0 0
    %433 = vmatmul.mubr.bf16.gmra.mrb[0].mxu0 %v321
    %v434 = vpop.f32.mrb[0].mxu0
    %v435 = vadd.f32 %v350, %v434
    %v436 = vpop.f32.mrb[0].mxu0
    %v437 = vpop.f32.mrb[0].mxu0
    %v438 = vadd.f32 %v350, %v437
    %v439 = vpop.f32.mrb[0].mxu0
    %440 = vmatprep.mubr.bf16.mxu0 0
    %441 = vmatmul.mubr.bf16.gmra.mrb[0].mxu0 %v322
    %v442 = vpop.f32.mrb[0].mxu0
    %v443 = vadd.f32 %v350, %v442
    %v444 = vpop.f32.mrb[0].mxu0
    %v445 = vpop.f32.mrb[0].mxu0
    %v446 = vadd.f32 %v350, %v445
    %v447 = vpop.f32.mrb[0].mxu0
    %448 = vmatprep.mubr.bf16.mxu0 0
    %449 = vmatmul.mubr.bf16.gmra.mrb[0].mxu0 %v323
    %v450 = vpop.f32.mrb[0].mxu0
    %v451 = vadd.f32 %v350, %v450
    %v452 = vpop.f32.mrb[0].mxu0
    %v453 = vpop.f32.mrb[0].mxu0
    %v454 = vadd.f32 %v350, %v453
    %v455 = vpop.f32.mrb[0].mxu0
    %456 = vmatprep.mubr.bf16.mxu0 0
    %457 = vmatmul.mubr.bf16.gmra.mrb[0].mxu0 %v324
    %v458 = vpop.f32.mrb[0].mxu0
    %v459 = vadd.f32 %v350, %v458
    %v460 = vpop.f32.mrb[0].mxu0
    %v461 = vpop.f32.mrb[0].mxu0
    %v462 = vadd.f32 %v350, %v461
    %v463 = vpop.f32.mrb[0].mxu0
    %464 = vmatprep.mubr.bf16.mxu0 0
    %465 = vmatmul.mubr.bf16.gmra.mrb[0].mxu0 %v325
    %v466 = vpop.f32.mrb[0].mxu0
    %v467 = vadd.f32 %v350, %v466
    %v468 = vpop.f32.mrb[0].mxu0
    %v469 = vpop.f32.mrb[0].mxu0
    %v470 = vadd.f32 %v350, %v469
    %v471 = vpop.f32.mrb[0].mxu0
    %472 = vmatprep.mubr.bf16.mxu0 0
    %473 = vmatmul.mubr.bf16.gmra.mrb[0].mxu0 %v326
    %v474 = vpop.f32.mrb[0].mxu0
    %v475 = vadd.f32 %v350, %v474
    %v476 = vpop.f32.mrb[0].mxu0
    %v477 = vpop.f32.mrb[0].mxu0
    %v478 = vadd.f32 %v350, %v477
    %v479 = vpop.f32.mrb[0].mxu0
    %480 = vmatprep.mubr.bf16.mxu0 0
    %481 = vmatmul.mubr.bf16.gmra.mrb[0].mxu0 %v327
    %v482 = vpop.f32.mrb[0].mxu0
    %v483 = vadd.f32 %v350, %v482
    %v484 = vpop.f32.mrb[0].mxu0
    %v485 = vpop.f32.mrb[0].mxu0
    %v486 = vadd.f32 %v350, %v485
    %v487 = vpop.f32.mrb[0].mxu0
    %488 = vmatprep.mubr.bf16.mxu0 0
    %489 = vmatmul.mubr.bf16.gmra.mrb[0].mxu0 %v328
    %v490 = vpop.f32.mrb[0].mxu0
    %v491 = vadd.f32 %v350, %v490
    %v492 = vpop.f32.mrb[0].mxu0
    %v493 = vpop.f32.mrb[0].mxu0
    %v494 = vadd.f32 %v350, %v493
    %v495 = vpop.f32.mrb[0].mxu0
    %496 = vdwg.mxu0
    %v497 = vmax.f32 %v435, 0.0
    %v498 = vmax.f32 %v438, 0.0
    %v499 = vmax.f32 %v443, 0.0
    %v500 = vmax.f32 %v446, 0.0
    %v501 = vmax.f32 %v451, 0.0
    %v502 = vmax.f32 %v454, 0.0
    %v503 = vmax.f32 %v459, 0.0
    %v504 = vmax.f32 %v462, 0.0
    %v505 = vmax.f32 %v467, 0.0
    %v506 = vmax.f32 %v470, 0.0
    %v507 = vmax.f32 %v475, 0.0
    %v508 = vmax.f32 %v478, 0.0
    %v509 = vmax.f32 %v483, 0.0
    %v510 = vmax.f32 %v486, 0.0
    %v511 = vmax.f32 %v491, 0.0
    %v512 = vmax.f32 %v494, 0.0
    %v513 = vpack.c.bf16 %v498, %v497
    %v514 = vpack.c.bf16 %v500, %v499
    %v515 = vpack.c.bf16 %v502, %v501
    %v516 = vpack.c.bf16 %v504, %v503
    %v517 = vpack.c.bf16 %v506, %v505
    %v518 = vpack.c.bf16 %v508, %v507
    %v519 = vpack.c.bf16 %v510, %v509
    %v520 = vpack.c.bf16 %v512, %v511
    %v521 = vld [vmem:[#allocation2] sm:$0xf]
    %v522 = vld [vmem:[#allocation2 + $0x4] sm:$0xf]
    %v523 = vld [vmem:[#allocation2 + $0x8] sm:$0xf]
    %v524 = vld [vmem:[#allocation2 + $0xc] sm:$0xf]
    %v525 = vld [vmem:[#allocation2 + $0x10] sm:$0xf]
    %v526 = vld [vmem:[#allocation2 + $0x14] sm:$0xf]
    %v527 = vld [vmem:[#allocation2 + $0x18] sm:$0xf]
    %v528 = vld [vmem:[#allocation2 + $0x1c] sm:$0xf]
    %v529 = vld [vmem:[#allocation2 + $0x20] sm:$0xf]
    %v530 = vld [vmem:[#allocation2 + $0x24] sm:$0xf]
    %v531 = vld [vmem:[#allocation2 + $0x28] sm:$0xf]
    %v532 = vld [vmem:[#allocation2 + $0x2c] sm:$0xf]
    %v533 = vld [vmem:[#allocation2 + $0x30] sm:$0xf]
    %v534 = vld [vmem:[#allocation2 + $0x34] sm:$0xf]
    %v535 = vld [vmem:[#allocation2 + $0x38] sm:$0xf]
    %v536 = vld [vmem:[#allocation2 + $0x3c] sm:$0xf]
    %v537 = vld [vmem:[%s5] sm:$0x1]
    %v539 = vlaneseq
    %v540 = vshrl.u32 %v539, 7
    %v541 = vsub.s32 0, %v540
    %v542 = vrot.slane %v537, %v541
    %v560 = vunpack.c.l.b16 %v521
    %v561 = vunpack.c.l.b16 %v522
    %v562 = vunpack.c.l.b16 %v523
    %v563 = vunpack.c.l.b16 %v524
    %v564 = vunpack.c.l.b16 %v525
    %v565 = vunpack.c.l.b16 %v526
    %v566 = vunpack.c.l.b16 %v527
    %v567 = vunpack.c.l.b16 %v528
    %v568 = vunpack.c.l.b16 %v529
    %v569 = vunpack.c.l.b16 %v530
    %v570 = vunpack.c.l.b16 %v531
    %v571 = vunpack.c.l.b16 %v532
    %v572 = vunpack.c.l.b16 %v533
    %v573 = vunpack.c.l.b16 %v534
    %v574 = vunpack.c.l.b16 %v535
    %v575 = vunpack.c.l.b16 %v536
    %v576 = vpack.c.b16 %v561, %v560
    %v577 = vpack.c.b16 %v563, %v562
    %v578 = vpack.c.b16 %v565, %v564
    %v579 = vpack.c.b16 %v567, %v566
    %v580 = vpack.c.b16 %v569, %v568
    %v581 = vpack.c.b16 %v571, %v570
    %v582 = vpack.c.b16 %v573, %v572
    %v583 = vpack.c.b16 %v575, %v574
    %592 = vmatprep.subr.bf16.mxu0 0
    %593 = vmatpush1.bf16.msra.mxu0 %v576
    %594 = vmatprep.subr.bf16.mxu0 0
    %595 = vmatpush1.bf16.msra.mxu0 %v577
    %596 = vmatprep.subr.bf16.mxu0 0
    %597 = vmatpush1.bf16.msra.mxu0 %v578
    %598 = vmatprep.subr.bf16.mxu0 0
    %599 = vmatpush1.bf16.msra.mxu0 %v579
    %600 = vmatprep.subr.bf16.mxu0 0
    %601 = vmatpush1.bf16.msra.mxu0 %v580
    %602 = vmatprep.subr.bf16.mxu0 0
    %603 = vmatpush1.bf16.msra.mxu0 %v581
    %604 = vmatprep.subr.bf16.mxu0 0
    %605 = vmatpush1.bf16.msra.mxu0 %v582
    %606 = vmatprep.subr.bf16.mxu0 0
    %607 = vmatpush1.bf16.msra.mxu0 %v583
    %608 = vmatprep.subr.bf16.mxu0 0
    %609 = vmatpush1.bf16.msra.mxu0 0
    %610 = vmatprep.subr.bf16.mxu0 0
    %611 = vmatpush1.bf16.msra.mxu0 0
    %612 = vmatprep.subr.bf16.mxu0 0
    %613 = vmatpush1.bf16.msra.mxu0 0
    %614 = vmatprep.subr.bf16.mxu0 0
    %615 = vmatpush1.bf16.msra.mxu0 0
    %616 = vmatprep.subr.bf16.mxu0 0
    %617 = vmatpush1.bf16.msra.mxu0 0
    %618 = vmatprep.subr.bf16.mxu0 0
    %619 = vmatpush1.bf16.msra.mxu0 0
    %620 = vmatprep.subr.bf16.mxu0 0
    %621 = vmatpush1.bf16.msra.mxu0 0
    %622 = vmatprep.subr.bf16.mxu0 0
    %623 = vmatpush1.bf16.msra.mxu0 0
    %624 = vmatprep.mubr.bf16.mxu0 0
    %625 = vmatmul.mubr.bf16.gmra.mrb[0].mxu0 %v513
    %v626 = vpop.f32.mrb[0].mxu0
    %v627 = vadd.f32 %v542, %v626
    %v628 = vpop.f32.mrb[0].mxu0
    %v629 = vpop.f32.mrb[0].mxu0
    %v630 = vadd.f32 %v542, %v629
    %v631 = vpop.f32.mrb[0].mxu0
    %632 = vmatprep.mubr.bf16.mxu0 0
    %633 = vmatmul.mubr.bf16.gmra.mrb[0].mxu0 %v514
    %v634 = vpop.f32.mrb[0].mxu0
    %v635 = vadd.f32 %v542, %v634
    %v636 = vpop.f32.mrb[0].mxu0
    %v637 = vpop.f32.mrb[0].mxu0
    %v638 = vadd.f32 %v542, %v637
    %v639 = vpop.f32.mrb[0].mxu0
    %640 = vmatprep.mubr.bf16.mxu0 0
    %641 = vmatmul.mubr.bf16.gmra.mrb[0].mxu0 %v515
    %v642 = vpop.f32.mrb[0].mxu0
    %v643 = vadd.f32 %v542, %v642
    %v644 = vpop.f32.mrb[0].mxu0
    %v645 = vpop.f32.mrb[0].mxu0
    %v646 = vadd.f32 %v542, %v645
    %v647 = vpop.f32.mrb[0].mxu0
    %648 = vmatprep.mubr.bf16.mxu0 0
    %649 = vmatmul.mubr.bf16.gmra.mrb[0].mxu0 %v516
    %v650 = vpop.f32.mrb[0].mxu0
    %v651 = vadd.f32 %v542, %v650
    %v652 = vpop.f32.mrb[0].mxu0
    %v653 = vpop.f32.mrb[0].mxu0
    %v654 = vadd.f32 %v542, %v653
    %v655 = vpop.f32.mrb[0].mxu0
    %656 = vmatprep.mubr.bf16.mxu0 0
    %657 = vmatmul.mubr.bf16.gmra.mrb[0].mxu0 %v517
    %v658 = vpop.f32.mrb[0].mxu0
    %v659 = vadd.f32 %v542, %v658
    %v660 = vpop.f32.mrb[0].mxu0
    %v661 = vpop.f32.mrb[0].mxu0
    %v662 = vadd.f32 %v542, %v661
    %v663 = vpop.f32.mrb[0].mxu0
    %664 = vmatprep.mubr.bf16.mxu0 0
    %665 = vmatmul.mubr.bf16.gmra.mrb[0].mxu0 %v518
    %v666 = vpop.f32.mrb[0].mxu0
    %v667 = vadd.f32 %v542, %v666
    %v668 = vpop.f32.mrb[0].mxu0
    %v669 = vpop.f32.mrb[0].mxu0
    %v670 = vadd.f32 %v542, %v669
    %v671 = vpop.f32.mrb[0].mxu0
    %672 = vmatprep.mubr.bf16.mxu0 0
    %673 = vmatmul.mubr.bf16.gmra.mrb[0].mxu0 %v519
    %v674 = vpop.f32.mrb[0].mxu0
    %v675 = vadd.f32 %v542, %v674
    %v676 = vpop.f32.mrb[0].mxu0
    %v677 = vpop.f32.mrb[0].mxu0
    %v678 = vadd.f32 %v542, %v677
    %v679 = vpop.f32.mrb[0].mxu0
    %680 = vmatprep.mubr.bf16.mxu0 0
    %681 = vmatmul.mubr.bf16.gmra.mrb[0].mxu0 %v520
    %v682 = vpop.f32.mrb[0].mxu0
    %v683 = vadd.f32 %v542, %v682
    %v684 = vpop.f32.mrb[0].mxu0
    %v685 = vpop.f32.mrb[0].mxu0
    %v686 = vadd.f32 %v542, %v685
    %v687 = vpop.f32.mrb[0].mxu0
    %688 = vdwg.mxu0
    %689 = vmax.xlane.f32.xlu0 %v627
    %v690 = vpop.xlane.xlu0 %689
    %691 = vmax.xlane.f32.xlu0 %v630
    %v692 = vpop.xlane.xlu0 %691
    %693 = vmax.xlane.f32.xlu0 %v635
    %v694 = vpop.xlane.xlu0 %693
    %695 = vmax.xlane.f32.xlu0 %v638
    %v696 = vpop.xlane.xlu0 %695
    %697 = vmax.xlane.f32.xlu0 %v643
    %v698 = vpop.xlane.xlu0 %697
    %699 = vmax.xlane.f32.xlu0 %v646
    %v700 = vpop.xlane.xlu0 %699
    %701 = vmax.xlane.f32.xlu0 %v651
    %v702 = vpop.xlane.xlu0 %701
    %703 = vmax.xlane.f32.xlu0 %v654
    %v704 = vpop.xlane.xlu0 %703
    %705 = vmax.xlane.f32.xlu0 %v659
    %v706 = vpop.xlane.xlu0 %705
    %707 = vmax.xlane.f32.xlu0 %v662
    %v708 = vpop.xlane.xlu0 %707
    %709 = vmax.xlane.f32.xlu0 %v667
    %v710 = vpop.xlane.xlu0 %709
    %711 = vmax.xlane.f32.xlu0 %v670
    %v712 = vpop.xlane.xlu0 %711
    %713 = vmax.xlane.f32.xlu0 %v675
    %v714 = vpop.xlane.xlu0 %713
    %715 = vmax.xlane.f32.xlu0 %v678
    %v716 = vpop.xlane.xlu0 %715
    %717 = vmax.xlane.f32.xlu0 %v683
    %v718 = vpop.xlane.xlu0 %717
    %719 = vmax.xlane.f32.xlu0 %v686
    %v720 = vpop.xlane.xlu0 %719
    %v721 = vsub.f32 %v627, %v690
    %v722 = vsub.f32 %v630, %v692
    %v723 = vsub.f32 %v635, %v694
    %v724 = vsub.f32 %v638, %v696
    %v725 = vsub.f32 %v643, %v698
    %v726 = vsub.f32 %v646, %v700
    %v727 = vsub.f32 %v651, %v702
    %v728 = vsub.f32 %v654, %v704
    %v729 = vsub.f32 %v659, %v706
    %v730 = vsub.f32 %v662, %v708
    %v731 = vsub.f32 %v667, %v710
    %v732 = vsub.f32 %v670, %v712
    %v733 = vsub.f32 %v675, %v714
    %v734 = vsub.f32 %v678, %v716
    %v735 = vsub.f32 %v683, %v718
    %v736 = vsub.f32 %v686, %v720
    %v737 = vmul.f32 %v721, 1.442695
    %v738 = vpow.pop %v737
    %v739 = vmul.f32 %v722, 1.442695
    %v740 = vpow.pop %v739
    %v741 = vmul.f32 %v723, 1.442695
    %v742 = vpow.pop %v741
    %v743 = vmul.f32 %v724, 1.442695
    %v744 = vpow.pop %v743
    %v745 = vmul.f32 %v725, 1.442695
    %v746 = vpow.pop %v745
    %v747 = vmul.f32 %v726, 1.442695
    %v748 = vpow.pop %v747
    %v749 = vmul.f32 %v727, 1.442695
    %v750 = vpow.pop %v749
    %v751 = vmul.f32 %v728, 1.442695
    %v752 = vpow.pop %v751
    %v753 = vmul.f32 %v729, 1.442695
    %v754 = vpow.pop %v753
    %v755 = vmul.f32 %v730, 1.442695
    %v756 = vpow.pop %v755
    %v757 = vmul.f32 %v731, 1.442695
    %v758 = vpow.pop %v757
    %v759 = vmul.f32 %v732, 1.442695
    %v760 = vpow.pop %v759
    %v761 = vmul.f32 %v733, 1.442695
    %v762 = vpow.pop %v761
    %v763 = vmul.f32 %v734, 1.442695
    %v764 = vpow.pop %v763
    %v765 = vmul.f32 %v735, 1.442695
    %v766 = vpow.pop %v765
    %v767 = vmul.f32 %v736, 1.442695
    %v768 = vpow.pop %v767
    %769 = vadd.xlane.f32.xlu0 %v738
    %v770 = vpop.xlane.xlu0 %769
    %771 = vadd.xlane.f32.xlu0 %v740
    %v772 = vpop.xlane.xlu0 %771
    %773 = vadd.xlane.f32.xlu0 %v742
    %v774 = vpop.xlane.xlu0 %773
    %775 = vadd.xlane.f32.xlu0 %v744
    %v776 = vpop.xlane.xlu0 %775
    %777 = vadd.xlane.f32.xlu0 %v746
    %v778 = vpop.xlane.xlu0 %777
    %779 = vadd.xlane.f32.xlu0 %v748
    %v780 = vpop.xlane.xlu0 %779
    %781 = vadd.xlane.f32.xlu0 %v750
    %v782 = vpop.xlane.xlu0 %781
    %783 = vadd.xlane.f32.xlu0 %v752
    %v784 = vpop.xlane.xlu0 %783
    %785 = vadd.xlane.f32.xlu0 %v754
    %v786 = vpop.xlane.xlu0 %785
    %787 = vadd.xlane.f32.xlu0 %v756
    %v788 = vpop.xlane.xlu0 %787
    %789 = vadd.xlane.f32.xlu0 %v758
    %v790 = vpop.xlane.xlu0 %789
    %791 = vadd.xlane.f32.xlu0 %v760
    %v792 = vpop.xlane.xlu0 %791
    %793 = vadd.xlane.f32.xlu0 %v762
    %v794 = vpop.xlane.xlu0 %793
    %795 = vadd.xlane.f32.xlu0 %v764
    %v796 = vpop.xlane.xlu0 %795
    %797 = vadd.xlane.f32.xlu0 %v766
    %v798 = vpop.xlane.xlu0 %797
    %799 = vadd.xlane.f32.xlu0 %v768
    %v800 = vpop.xlane.xlu0 %799
    %v801 = vrcp.pop %v770
    %v802 = vmul.f32 1.0, %v801
    %v803 = vrcp.pop %v772
    %v804 = vmul.f32 1.0, %v803
    %v805 = vrcp.pop %v774
    %v806 = vmul.f32 1.0, %v805
    %v807 = vrcp.pop %v776
    %v808 = vmul.f32 1.0, %v807
    %v809 = vrcp.pop %v778
    %v810 = vmul.f32 1.0, %v809
    %v811 = vrcp.pop %v780
    %v812 = vmul.f32 1.0, %v811
    %v813 = vrcp.pop %v782
    %v814 = vmul.f32 1.0, %v813
    %v815 = vrcp.pop %v784
    %v816 = vmul.f32 1.0, %v815
    %v817 = vrcp.pop %v786
    %v818 = vmul.f32 1.0, %v817
    %v819 = vrcp.pop %v788
    %v820 = vmul.f32 1.0, %v819
    %v821 = vrcp.pop %v790
    %v822 = vmul.f32 1.0, %v821
    %v823 = vrcp.pop %v792
    %v824 = vmul.f32 1.0, %v823
    %v825 = vrcp.pop %v794
    %v826 = vmul.f32 1.0, %v825
    %v827 = vrcp.pop %v796
    %v828 = vmul.f32 1.0, %v827
    %v829 = vrcp.pop %v798
    %v830 = vmul.f32 1.0, %v829
    %v831 = vrcp.pop %v800
    %v832 = vmul.f32 1.0, %v831
    %v833 = vmul.f32 %v738, %v802
    %v834 = vmul.f32 %v740, %v804
    %v835 = vmul.f32 %v742, %v806
    %v836 = vmul.f32 %v744, %v808
    %v837 = vmul.f32 %v746, %v810
    %v838 = vmul.f32 %v748, %v812
    %v839 = vmul.f32 %v750, %v814
    %v840 = vmul.f32 %v752, %v816
    %v841 = vmul.f32 %v754, %v818
    %v842 = vmul.f32 %v756, %v820
    %v843 = vmul.f32 %v758, %v822
    %v844 = vmul.f32 %v760, %v824
    %v845 = vmul.f32 %v762, %v826
    %v846 = vmul.f32 %v764, %v828
    %v847 = vmul.f32 %v766, %v830
    %v848 = vmul.f32 %v768, %v832
    %849 = vst [vmem:[%s6] sm:$0xff] %v833
    %850 = vst [vmem:[%s6 + $0x8] sm:$0xff] %v834
    %851 = vst [vmem:[%s6 + $0x10] sm:$0xff] %v835
    %852 = vst [vmem:[%s6 + $0x18] sm:$0xff] %v836
    %853 = vst [vmem:[%s6 + $0x20] sm:$0xff] %v837
    %854 = vst [vmem:[%s6 + $0x28] sm:$0xff] %v838
    %855 = vst [vmem:[%s6 + $0x30] sm:$0xff] %v839
    %856 = vst [vmem:[%s6 + $0x38] sm:$0xff] %v840
    %857 = vst [vmem:[%s6 + $0x40] sm:$0xff] %v841
    %858 = vst [vmem:[%s6 + $0x48] sm:$0xff] %v842
    %859 = vst [vmem:[%s6 + $0x50] sm:$0xff] %v843
    %860 = vst [vmem:[%s6 + $0x58] sm:$0xff] %v844
    %861 = vst [vmem:[%s6 + $0x60] sm:$0xff] %v845
    %862 = vst [vmem:[%s6 + $0x68] sm:$0xff] %v846
    %863 = vst [vmem:[%s6 + $0x70] sm:$0xff] %v847
    %864 = vst [vmem:[%s6 + $0x78] sm:$0xff] %v848
    // Predicated region
    $region30: #{simple_broken_model_forward.1} parent=1 // pred_check
      _
    $region31: #{simple_broken_model_forward.1} parent=1 // pred_check_branch
      %866 = sbr.rel (0) target = $region33
    $region32: #{simple_broken_model_forward.1} parent=1 // pred_region
      _
    $region33: #{simple_broken_model_forward.1} parent=1 // pred_fallthru
      _
    // Predicated region
    $region34: #{simple_broken_model_forward.1} parent=1 // pred_check
      _
    $region35: #{simple_broken_model_forward.1} parent=1 // pred_check_branch
      %868 = sbr.rel (0) target = $region37
    $region36: #{simple_broken_model_forward.1} parent=1 // pred_region
      _
    $region37: #{simple_broken_model_forward.1} parent=1 // pred_fallthru
      _
    %869 = vsyncpa [#allocation3], 1

</llo_original>
